<compile_context>
chip_gen: v7x
topology: tpu7x:2x2x1
jax: 0.10.0
libtpu: 0.0.40
codegen_flags: <defaults>
</compile_context>

<pallas_src>
import functools

import jax
import jax.numpy as jnp
from jax.experimental import pallas as pl
from jax.experimental.pallas import tpu as pltpu


def _label_smoothing_kernel(logits_ref, tar_ref, out_ref, *,
                            smoothing, masked, n_rows, vocab):
    i = pl.program_id(0)
    tile = logits_ref.shape[0]
    tar = tar_ref[...]                                         # (tile, 1) int32

    # Pass 1: per-row max in the native dtype (exact for bf16 as well).
    m = jnp.max(logits_ref[...], axis=-1, keepdims=True).astype(jnp.float32)

    # Pass 2: exp-sum and plain sum with f32 accumulation. The ref is
    # re-indexed and cast lane-by-lane instead of binding one persistent
    # (tile, V) f32 copy, so the input tile stays the only big live buffer.
    s = jnp.sum(jnp.exp(logits_ref[...].astype(jnp.float32) - m),
                axis=-1, keepdims=True)                        # (tile, 1), EUP exp
    sum_x = jnp.sum(logits_ref[...].astype(jnp.float32),
                    axis=-1, keepdims=True)                    # (tile, 1)
    lse = jnp.log(s) + m                                       # (tile, 1)

    # Pass 3: logit at the target index via one-hot select + lane reduce.
    # Exact in the native dtype (one non-zero per row). Out-of-range targets
    # gather 0 instead of raising (torch.gather would error) -- see wrapper.
    col = jax.lax.broadcasted_iota(jnp.int32, (tile, vocab), 1)
    gathered = jnp.sum(jnp.where(col == tar, logits_ref[...], 0),
                       axis=-1, keepdims=True).astype(jnp.float32)

    # loss = -logp[tar]*(1-s) - mean(logp)*s, with logp = x - lse.
    nll = -(gathered - lse) * (1.0 - smoothing)
    smooth = -(sum_x * (1.0 / vocab) - lse) * smoothing
    raw_loss = nll + smooth                                    # (tile, 1)

    # Mask rows past the true N (the trailing partial block reads padding
    # which may hold arbitrary bits -> use where, not multiply, to kill NaNs).
    row = jax.lax.broadcasted_iota(jnp.int32, (tile, 1), 0)
    valid = (i * tile + row) < n_rows                          # (tile, 1) bool

    if masked:
        w = jnp.logical_and(valid, tar != 0).astype(jnp.float32)
    else:
        w = valid.astype(jnp.float32)

    num_p = jnp.sum(jnp.where(valid, raw_loss, 0.0) * w)       # scalar
    den_p = jnp.sum(w)                                         # scalar

    # Packed lane-dense (1, 8, 128) partials: sublane 0 = numerator,
    # sublane 1 = denominator. One output DMA per grid step, no carried
    # accumulator, so the grid axis stays "parallel".
    sub = jax.lax.broadcasted_iota(jnp.int32, out_ref.shape, 1)
    out_ref[...] = jnp.where(
        sub == 0, num_p, jnp.where(sub == 1, den_p, 0.0)).astype(jnp.float32)


def _vmem_capacity_bytes():
    """Physical per-core VMEM; conservative (v7x = 64 MiB) fallback."""
    try:
        cap = int(pltpu.get_tpu_info().vmem_capacity_bytes)
        if cap > 0:
            return cap
    except Exception:  # older jax / abstract tracing without a device
        pass
    return 64 << 20


def _choose_row_tile(n_rows, vocab, itemsize, vmem_bytes):
    # Bytes per tile row kept live in VMEM: the double-buffered input block
    # plus ~2 f32-width working copies for the exp / log-softmax
    # intermediates Mosaic may stage in VMEM.
    per_row = 2 * vocab * itemsize + 2 * vocab * 4
    budget = vmem_bytes // 2                 # headroom for outputs / scratch
    rows = max(16, budget // per_row)
    rows -= rows % 16                        # sublane multiple for f32 & bf16

    padded_n = -(-n_rows // 16) * 16
    rows = min(rows, padded_n)               # never larger than the problem
    # Keep >= ~4 grid steps when the problem is big enough so v7x's two
    # TensorCores both get work and the pipeline has blocks to overlap.
    if padded_n >= 4 * 16:
        quarter = -(-(padded_n // 4) // 16) * 16
        rows = min(rows, quarter)
    return max(16, rows)


def label_smoothing_loss(y_pred, y_tar, *, smoothing, masked=True, row_tile=None):
    """y_pred: (N, V) float logits; y_tar: (N,) integer class indices.

    Returns the scalar smoothed cross-entropy loss, always in float32.
    Targets must lie in [0, V): out-of-range indices gather 0 rather than
    raising (unlike torch.gather). masked=True with zero non-pad targets
    divides by zero, matching the reference PyTorch module.
    """
    N, V = y_pred.shape
    itemsize = jnp.dtype(y_pred.dtype).itemsize
    vmem_cap = _vmem_capacity_bytes()
    if row_tile is None:
        row_tile = _choose_row_tile(N, V, itemsize, vmem_cap)
    num_blocks = pl.cdiv(N, row_tile)

    tar2d = y_tar.astype(jnp.int32).reshape(N, 1)

    kernel = functools.partial(
        _label_smoothing_kernel,
        smoothing=float(smoothing), masked=bool(masked), n_rows=N, vocab=V)

    cost = pl.CostEstimate(
        flops=6 * N * V,
        transcendentals=N * V + N,
        bytes_accessed=N * V * itemsize + N * 4 + num_blocks * 8 * 128 * 4)

    per_row = 2 * V * itemsize + 2 * V * 4
    vmem_limit = int(min(vmem_cap - (8 << 20),
                         max(32 << 20, row_tile * per_row + (4 << 20))))

    part = pl.pallas_call(
        kernel,
        out_shape=jax.ShapeDtypeStruct((num_blocks, 8, 128), jnp.float32),
        grid_spec=pltpu.PrefetchScalarGridSpec(
            num_scalar_prefetch=0,
            grid=(num_blocks,),
            in_specs=[
                pl.BlockSpec((row_tile, V), lambda i: (i, 0)),
                pl.BlockSpec((row_tile, 1), lambda i: (i, 0)),
            ],
            out_specs=pl.BlockSpec((1, 8, 128), lambda i: (i, 0, 0)),
        ),
        compiler_params=pltpu.CompilerParams(
            dimension_semantics=("parallel",),   # row blocks independent
            vmem_limit_bytes=vmem_limit,
        ),
        cost_estimate=cost,
    )(y_pred, tar2d)

    num = jnp.sum(part[:, 0, 0])
    den = jnp.sum(part[:, 1, 0])
    return num / den                         # float32 always


def _reference(y_pred, y_tar, smoothing, masked=True):
    logp = jax.nn.log_softmax(y_pred.astype(jnp.float32), axis=-1)
    nll = -jnp.take_along_axis(logp, y_tar[:, None], axis=-1)[:, 0] * (1.0 - smoothing)
    sm = -jnp.mean(logp, axis=-1) * smoothing
    loss = nll + sm
    if masked:
        mask = (y_tar != 0).astype(loss.dtype)
        return jnp.sum(loss * mask) / jnp.sum(mask)
    return jnp.mean(loss)


if __name__ == "__main__":
    key = jax.random.PRNGKey(0)
    k1, k2, k3, k4 = jax.random.split(key, 4)

    # Small shapes: 16 rows (e.g. batch*seq), vocab 128.
    N, V = 16, 128
    smoothing = 0.1

    y_pred = jax.random.normal(k1, (N, V), dtype=jnp.float32)
    y_tar = jax.random.randint(k2, (N,), 0, V, dtype=jnp.int32)
    y_tar = y_tar.at[0].set(0).at[5].set(0)   # force a few pad targets

    out = label_smoothing_loss(y_pred, y_tar, smoothing=smoothing, masked=True)
    out = jax.block_until_ready(out)
    ref = _reference(y_pred, y_tar, smoothing, masked=True)
    assert jnp.allclose(out, ref, rtol=1e-5, atol=1e-5), (out, ref)

    out2 = label_smoothing_loss(y_pred, y_tar, smoothing=smoothing, masked=False)
    out2 = jax.block_until_ready(out2)
    ref2 = _reference(y_pred, y_tar, smoothing, masked=False)
    assert jnp.allclose(out2, ref2, rtol=1e-5, atol=1e-5), (out2, ref2)

    # Ragged N (partial trailing block) + bf16 logits regression check.
    N3 = 40
    y_pred3 = jax.random.normal(k3, (N3, V), dtype=jnp.float32).astype(jnp.bfloat16)
    y_tar3 = jax.random.randint(k4, (N3,), 0, V, dtype=jnp.int32)
    y_tar3 = y_tar3.at[3].set(0).at[17].set(0)
    out3 = label_smoothing_loss(y_pred3, y_tar3, smoothing=smoothing, masked=True)
    out3 = jax.block_until_ready(out3)
    ref3 = _reference(y_pred3, y_tar3, smoothing, masked=True)
    assert jnp.allclose(out3, ref3, rtol=1e-4, atol=1e-4), (out3, ref3)

    print("KERNEL_OK")
</pallas_src>

<mosaic_0001>
module attributes {stable_mosaic.version = 11 : i64} {
  func.func @_label_smoothing_kernel(%arg0: i32, %arg1: memref<16x128xf32, #tpu.memory_space<vmem>>, %arg2: memref<16x1xi32, #tpu.memory_space<vmem>>, %arg3: memref<1x8x128xf32, #tpu.memory_space<vmem>>) attributes {dimension_semantics = [#tpu.dimension_semantics<parallel>], iteration_bounds = array<i64: 1>, scalar_prefetch = 0 : i64, scratch_operands = 0 : i64, tpu.core_type = #tpu.core_type<tc>, window_params = [{transform_indices = @transform_0, window_bounds = array<i64: 16, 128>}, {transform_indices = @transform_1, window_bounds = array<i64: 16, 1>}, {transform_indices = @transform_2, window_bounds = array<i64: 1, 8, 128>}]} {
    %c0 = arith.constant 0 : index
    %c0_0 = arith.constant 0 : index
    %0 = vector.load %arg2[%c0, %c0_0] : memref<16x1xi32, #tpu.memory_space<vmem>>, vector<16x1xi32>
    %c0_1 = arith.constant 0 : index
    %c0_2 = arith.constant 0 : index
    %1 = vector.load %arg1[%c0_1, %c0_2] : memref<16x128xf32, #tpu.memory_space<vmem>>, vector<16x128xf32>
    %cst = arith.constant dense<0xFF800000> : vector<16xf32>
    %2 = vector.multi_reduction <maximumf>, %1, %cst [1] : vector<16x128xf32> to vector<16xf32>
    %3 = vector.shape_cast %2 : vector<16xf32> to vector<16x1xf32>
    %c0_3 = arith.constant 0 : index
    %c0_4 = arith.constant 0 : index
    %4 = vector.load %arg1[%c0_3, %c0_4] : memref<16x128xf32, #tpu.memory_space<vmem>>, vector<16x128xf32>
    %5 = vector.broadcast %3 : vector<16x1xf32> to vector<16x128xf32>
    %6 = arith.subf %4, %5 : vector<16x128xf32>
    %7 = math.exp %6 : vector<16x128xf32>
    %cst_5 = arith.constant dense<0.000000e+00> : vector<16xf32>
    %8 = vector.multi_reduction <add>, %7, %cst_5 [1] : vector<16x128xf32> to vector<16xf32>
    %9 = vector.shape_cast %8 : vector<16xf32> to vector<16x1xf32>
    %c0_6 = arith.constant 0 : index
    %c0_7 = arith.constant 0 : index
    %10 = vector.load %arg1[%c0_6, %c0_7] : memref<16x128xf32, #tpu.memory_space<vmem>>, vector<16x128xf32>
    %cst_8 = arith.constant dense<0.000000e+00> : vector<16xf32>
    %11 = vector.multi_reduction <add>, %10, %cst_8 [1] : vector<16x128xf32> to vector<16xf32>
    %12 = vector.shape_cast %11 : vector<16xf32> to vector<16x1xf32>
    %13 = math.log %9 : vector<16x1xf32>
    %14 = arith.addf %13, %3 : vector<16x1xf32>
    %15 = tpu.iota {dimensions = array<i32: 1>} : vector<16x128xi32>
    %16 = vector.broadcast %0 : vector<16x1xi32> to vector<16x128xi32>
    %17 = arith.cmpi eq, %15, %16 : vector<16x128xi32>
    %c0_9 = arith.constant 0 : index
    %c0_10 = arith.constant 0 : index
    %18 = vector.load %arg1[%c0_9, %c0_10] : memref<16x128xf32, #tpu.memory_space<vmem>>, vector<16x128xf32>
    %c0_i32 = arith.constant 0 : i32
    %19 = arith.sitofp %c0_i32 : i32 to f32
    %20 = vector.broadcast %19 : f32 to vector<16x128xf32>
    %21 = arith.select %17, %18, %20 : vector<16x128xi1>, vector<16x128xf32>
    %cst_11 = arith.constant dense<0.000000e+00> : vector<16xf32>
    %22 = vector.multi_reduction <add>, %21, %cst_11 [1] : vector<16x128xf32> to vector<16xf32>
    %23 = vector.shape_cast %22 : vector<16xf32> to vector<16x1xf32>
    %24 = arith.subf %23, %14 : vector<16x1xf32>
    %cst_12 = arith.constant 0.000000e+00 : f32
    %25 = vector.broadcast %cst_12 : f32 to vector<16x1xf32>
    %26 = arith.subf %25, %24 : vector<16x1xf32>
    %cst_13 = arith.constant 0.899999976 : f32
    %27 = vector.broadcast %cst_13 : f32 to vector<16x1xf32>
    %28 = arith.mulf %26, %27 : vector<16x1xf32>
    %cst_14 = arith.constant 7.812500e-03 : f32
    %29 = vector.broadcast %cst_14 : f32 to vector<16x1xf32>
    %30 = arith.mulf %12, %29 : vector<16x1xf32>
    %31 = arith.subf %30, %14 : vector<16x1xf32>
    %cst_15 = arith.constant 0.000000e+00 : f32
    %32 = vector.broadcast %cst_15 : f32 to vector<16x1xf32>
    %33 = arith.subf %32, %31 : vector<16x1xf32>
    %cst_16 = arith.constant 1.000000e-01 : f32
    %34 = vector.broadcast %cst_16 : f32 to vector<16x1xf32>
    %35 = arith.mulf %33, %34 : vector<16x1xf32>
    %36 = arith.addf %28, %35 : vector<16x1xf32>
    %37 = tpu.iota {dimensions = array<i32: 0>} : vector<16x1xi32>
    %c16_i32 = arith.constant 16 : i32
    %38 = arith.muli %arg0, %c16_i32 : i32
    %39 = vector.broadcast %38 : i32 to vector<16x1xi32>
    %40 = arith.addi %39, %37 : vector<16x1xi32>
    %c16_i32_17 = arith.constant 16 : i32
    %41 = vector.broadcast %c16_i32_17 : i32 to vector<16x1xi32>
    %42 = arith.cmpi slt, %40, %41 : vector<16x1xi32>
    %c0_i32_18 = arith.constant 0 : i32
    %43 = vector.broadcast %c0_i32_18 : i32 to vector<16x1xi32>
    %44 = arith.cmpi ne, %0, %43 : vector<16x1xi32>
    %45 = arith.andi %42, %44 : vector<16x1xi1>
    %46 = arith.extui %45 : vector<16x1xi1> to vector<16x1xi32>
    %47 = arith.sitofp %46 : vector<16x1xi32> to vector<16x1xf32>
    %cst_19 = arith.constant 0.000000e+00 : f32
    %48 = vector.broadcast %cst_19 : f32 to vector<16x1xf32>
    %49 = arith.select %42, %36, %48 : vector<16x1xi1>, vector<16x1xf32>
    %50 = arith.mulf %49, %47 : vector<16x1xf32>
    %51 = vector.shape_cast %50 : vector<16x1xf32> to vector<1x16x1xf32>
    %cst_20 = arith.constant dense<0.000000e+00> : vector<1xf32>
    %52 = vector.multi_reduction <add>, %51, %cst_20 [1, 2] : vector<1x16x1xf32> to vector<1xf32>
    %53 = vector.shape_cast %52 : vector<1xf32> to vector<1x1x1xf32>
    %54 = vector.extract %53[0, 0, 0] : f32 from vector<1x1x1xf32>
    %55 = vector.shape_cast %47 : vector<16x1xf32> to vector<1x16x1xf32>
    %cst_21 = arith.constant dense<0.000000e+00> : vector<1xf32>
    %56 = vector.multi_reduction <add>, %55, %cst_21 [1, 2] : vector<1x16x1xf32> to vector<1xf32>
    %57 = vector.shape_cast %56 : vector<1xf32> to vector<1x1x1xf32>
    %58 = vector.extract %57[0, 0, 0] : f32 from vector<1x1x1xf32>
    %59 = tpu.iota {dimensions = array<i32: 1>} : vector<1x8x128xi32>
    %c0_i32_22 = arith.constant 0 : i32
    %60 = vector.broadcast %c0_i32_22 : i32 to vector<1x8x128xi32>
    %61 = arith.cmpi eq, %59, %60 : vector<1x8x128xi32>
    %c1_i32 = arith.constant 1 : i32
    %62 = vector.broadcast %c1_i32 : i32 to vector<1x8x128xi32>
    %63 = arith.cmpi eq, %59, %62 : vector<1x8x128xi32>
    %cst_23 = arith.constant 0.000000e+00 : f32
    %64 = vector.broadcast %58 : f32 to vector<1x8x128xf32>
    %65 = vector.broadcast %cst_23 : f32 to vector<1x8x128xf32>
    %66 = arith.select %63, %64, %65 : vector<1x8x128xi1>, vector<1x8x128xf32>
    %67 = vector.broadcast %54 : f32 to vector<1x8x128xf32>
    %68 = arith.select %61, %67, %66 : vector<1x8x128xi1>, vector<1x8x128xf32>
    %c0_24 = arith.constant 0 : index
    %c0_25 = arith.constant 0 : index
    %c0_26 = arith.constant 0 : index
    %69 = vector.load %arg3[%c0_24, %c0_25, %c0_26] : memref<1x8x128xf32, #tpu.memory_space<vmem>>, vector<1x8x128xf32>
    tpu.vector_store %arg3[%c0_24, %c0_25, %c0_26], %68 {strides = array<i32>} : memref<1x8x128xf32, #tpu.memory_space<vmem>>, vector<1x8x128xf32>,
    return
  }
  func.func @transform_0(%arg0: i32) -> (i32, i32) {
    %c0_i32 = arith.constant 0 : i32
    %c0_i32_0 = arith.constant 0 : i32
    return %arg0, %c0_i32 : i32, i32
  }
  func.func @transform_1(%arg0: i32) -> (i32, i32) {
    %c0_i32 = arith.constant 0 : i32
    %c0_i32_0 = arith.constant 0 : i32
    return %arg0, %c0_i32 : i32, i32
  }
  func.func @transform_2(%arg0: i32) -> (i32, i32, i32) {
    %c0_i32 = arith.constant 0 : i32
    %c0_i32_0 = arith.constant 0 : i32
    %c0_i32_1 = arith.constant 0 : i32
    return %arg0, %c0_i32, %c0_i32_0 : i32, i32, i32
  }
}

</mosaic_0001>

<llo_original>
// kernel: tpu_custom_call.1
$region0: #{tpu_custom_call.1}
  #allocation0 [shape = 'u32[]', space=smem, size = 0x4, offset = 0x4, fixed_abs, tag = 'smem constant byte address 0x4 - core index']
  #allocation1 [shape = 'u32[144,128]{1,0:T(1,128)}', space=vmem, size = 0x12000, scoped, tag = 'internal scratch']
  %s0 = inlined_call_operand.vmem [shape: f32[16,128], index: 0, kind: input, shape index: {}]
  %s1 = inlined_call_operand.vmem [shape: s32[16,1], index: 1, kind: input, shape index: {}]
  %s2 = inlined_call_operand.hbm [shape: f32[1,8,128], index: 2, kind: output, shape index: {}]
  %s3 = sld [smem:[#allocation0]]
  $region18: #{tpu_custom_call.1} parent=0
    _
  %s5 = ssub.s32 1, %s3
  %s6 = scalar_select 0, %s5, %s3
  $region1: #{tpu_custom_call.1} parent=0
    #allocation2 [shape = 'u8[4096]{0}', space=vmem, size = 0x1000, scoped, tag = 'output window, operand 0, single buffered']
    #allocation3 [shape = 's32[1]{0}', space=sflag, size = 0x4, scoped, tag = 'scoped memory for tpu_custom_call.1']
    %7 = vsyncpa [#allocation3], 0
    // Predicated region
    $region2: #{tpu_custom_call.1} parent=1 // pred_check
      _
    $region3: #{tpu_custom_call.1} parent=1 // pred_check_branch
      %9 = sbr.rel (0) target = $region5
    $region4: #{tpu_custom_call.1} parent=1 // pred_region
      _
    $region5: #{tpu_custom_call.1} parent=1 // pred_fallthru
      _
    // Predicated region
    $region6: #{tpu_custom_call.1} parent=1 // pred_check
      _
    $region7: #{tpu_custom_call.1} parent=1 // pred_check_branch
      %11 = sbr.rel (0) target = $region9
    $region8: #{tpu_custom_call.1} parent=1 // pred_region
      _
    $region9: #{tpu_custom_call.1} parent=1 // pred_fallthru
      _
    %v12 = vld [vmem:[%s1] sm:$0xff]
    %v13 = vld [vmem:[%s1 + $0x8] sm:$0xff]
    %v14 = vld [vmem:[%s0] sm:$0xff]
    %v15 = vld [vmem:[%s0 + $0x8] sm:$0xff]
    %16 = vmax.xlane.f32.xlu0 %v14
    %v17 = vpop.xlane.xlu0 %16
    %18 = vmax.xlane.f32.xlu0 %v15
    %v19 = vpop.xlane.xlu0 %18
    %v20 = vsub.f32 %v14, %v17
    %v21 = vsub.f32 %v15, %v19
    %v22 = vmul.f32 %v20, 1.442695
    %v23 = vpow.pop %v22
    %v24 = vmul.f32 %v21, 1.442695
    %v25 = vpow.pop %v24
    %26 = vadd.xlane.f32.xlu0 %v23
    %v27 = vpop.xlane.xlu0 %26
    %28 = vadd.xlane.f32.xlu0 %v25
    %v29 = vpop.xlane.xlu0 %28
    %30 = vadd.xlane.f32.xlu0 %v14
    %v31 = vpop.xlane.xlu0 %30
    %32 = vadd.xlane.f32.xlu0 %v15
    %v33 = vpop.xlane.xlu0 %32
    %v34 = vlog2.pop %v27
    %v35 = vmul.f32 %v34, 0.6931472
    %v36 = vlog2.pop %v29
    %v37 = vmul.f32 %v36, 0.6931472
    %v38 = vadd.f32 %v35, %v17
    %v39 = vadd.f32 %v37, %v19
    %v40 = vlaneseq
    %v41 = vand.u32 %v40, 127
    %42 = vset.pattern.permute.xlu0 0
    %43 = vperm.xlu0 %42, %v12
    %v44 = vpop.permute.xlu0 %43
    %45 = vset.pattern.permute.xlu0 0
    %46 = vperm.xlu0 %45, %v13
    %v47 = vpop.permute.xlu0 %46
    %vm48 = vcmp.eq.s32.totalorder %v41, %v44
    %vm49 = vcmp.eq.s32.totalorder %v41, %v47
    %v50 = vsel %vm48, %v14, 0.0
    %v51 = vsel %vm49, %v15, 0.0
    %52 = vadd.xlane.f32.xlu0 %v50
    %v53 = vpop.xlane.xlu0 %52
    %54 = vadd.xlane.f32.xlu0 %v51
    %v55 = vpop.xlane.xlu0 %54
    %v56 = vsub.f32 %v53, %v38
    %v57 = vsub.f32 %v55, %v39
    %v58 = vsub.f32 0.0, %v56
    %v59 = vsub.f32 0.0, %v57
    %v60 = vmul.f32 %v58, 0.9
    %v61 = vmul.f32 %v59, 0.9
    %v62 = vmul.f32 %v31, 0.0078125
    %v63 = vmul.f32 %v33, 0.0078125
    %v64 = vsub.f32 %v62, %v38
    %v65 = vsub.f32 %v63, %v39
    %v66 = vsub.f32 0.0, %v64
    %v67 = vsub.f32 0.0, %v65
    %v68 = vmul.f32 %v66, 0.1
    %v69 = vmul.f32 %v67, 0.1
    %v70 = vadd.f32 %v60, %v68
    %v71 = vadd.f32 %v61, %v69
    %v72 = vlaneseq
    %v73 = vshrl.u32 %v72, 7
    %v74 = vadd.s32 %v73, 8
    %s75 = smul.u32 0, 16
    %v76 = vstv %s75
    %v77 = vadd.s32 %v76, %v73
    %v78 = vadd.s32 %v76, %v74
    %vm79 = vcmp.lt.s32.totalorder %v77, 16
    %vm80 = vcmp.lt.s32.totalorder %v78, 16
    %vm81 = vcmp.ne.s32.totalorder %v12, 0
    %vm82 = vcmp.ne.s32.totalorder %v13, 0
    %vm83 = vmand %vm79, %vm81
    %vm84 = vmand %vm80, %vm82
    %v85 = vsel %vm83, 1, 0
    %v86 = vsel %vm84, 1, 0
    %v87 = vcvt.s32.f32 %v85
    %v88 = vcvt.s32.f32 %v86
    %v89 = vsel %vm79, %v70, 0.0
    %v90 = vsel %vm80, %v71, 0.0
    %v91 = vmul.f32 %v89, %v87
    %v92 = vmul.f32 %v90, %v88
    %vm93 = vcmask 7168
    %v94 = vsel %vm93, %v91, 0.0
    %v95 = vsel %vm93, %v92, 0.0
    %v96 = vadd.f32 %v94, %v95
    %97 = vadd.xlane.f32.xlu0 %v96
    %v98 = vpop.xlane.xlu0 %97
    %v99 = vrot.slane %v98, 4
    %v100 = vadd.f32 %v98, %v99
    %v101 = vrot.slane %v100, 2
    %v102 = vadd.f32 %v100, %v101
    %v103 = vrot.slane %v102, 1
    %v104 = vadd.f32 %v102, %v103
    %s105 = vtos %v104
    %v106 = vsel %vm93, %v87, 0.0
    %v107 = vsel %vm93, %v88, 0.0
    %v108 = vadd.f32 %v106, %v107
    %109 = vadd.xlane.f32.xlu0 %v108
    %v110 = vpop.xlane.xlu0 %109
    %v111 = vrot.slane %v110, 4
    %v112 = vadd.f32 %v110, %v111
    %v113 = vrot.slane %v112, 2
    %v114 = vadd.f32 %v112, %v113
    %v115 = vrot.slane %v114, 1
    %v116 = vadd.f32 %v114, %v115
    %s117 = vtos %v116
    %vm118 = vcmp.eq.s32.totalorder %v73, 0
    %vm119 = vcmp.eq.s32.totalorder %v73, 1
    %v120 = vstv %s117
    %v121 = vsel %vm119, %v120, 0.0
    %v122 = vstv %s105
    %v123 = vsel %vm118, %v122, %v121
    %124 = vst [vmem:[#allocation2] sm:$0xff] %v123
    // Predicated region
    $region10: #{tpu_custom_call.1} parent=1 // pred_check
      _
    $region11: #{tpu_custom_call.1} parent=1 // pred_check_branch
      %126 = sbr.rel (0) target = $region13
    $region12: #{tpu_custom_call.1} parent=1 // pred_region
      %s128 = ssub.s32 128, 128
      %129 = vsyncadd [#allocation3], %s128
      %s131 = sshll.u32 [#allocation2], 4
      %s132 = int_to_ptr.vmem [resolvable:$true] %s131
      %134 = dma.vmem_to_hbm [thread:$0]  %s132, 128, %s2, [#allocation3]
    $region13: #{tpu_custom_call.1} parent=1 // pred_fallthru
      _
    // Predicated region
    $region14: #{tpu_custom_call.1} parent=1 // pred_check
      _
    $region15: #{tpu_custom_call.1} parent=1 // pred_check_branch
      %136 = sbr.rel (0) target = $region17
    $region16: #{tpu_custom_call.1} parent=1 // pred_region
      %137 = dma.done [#allocation3], 128
    $region17: #{tpu_custom_call.1} parent=1 // pred_fallthru
      _
    %138 = vsyncpa [#allocation3], 1

</llo_original>
